<compile_context>
chip_gen: v7x
topology: tpu7x:2x2x1
jax: 0.10.0
libtpu: 0.0.40
codegen_flags: <defaults>
</compile_context>

<pallas_src>
import functools
import math

import jax
import jax.numpy as jnp
from jax.experimental import pallas as pl
from jax.experimental.pallas import tpu as pltpu


def _gaussian_taps_1d(size: int, std: float):
    """Normalized 1-D Gaussian taps as plain Python floats (compile-time consts)."""
    mean = (size - 1) / 2.0
    taps = [
        (1.0 / (std * math.sqrt(2.0 * math.pi)))
        * math.exp(-(((i - mean) / std) ** 2) / 2.0)
        for i in range(size)
    ]
    total = sum(taps)
    return [t / total for t in taps]


def make_gaussian_weight(channels: int, kernel_size, sigma, dim: int = 2):
    """Full (C,1,K,K) weight identical to GaussianSmoothing.__init__ (reference check only)."""
    if isinstance(kernel_size, (int, float)):
        kernel_size = [int(kernel_size)] * dim
    if isinstance(sigma, (int, float)):
        sigma = [float(sigma)] * dim
    grids = jnp.meshgrid(
        *[jnp.arange(s, dtype=jnp.float32) for s in kernel_size], indexing="ij"
    )
    kernel = jnp.ones((), dtype=jnp.float32)
    for size, std, mgrid in zip(kernel_size, sigma, grids):
        mean = (size - 1) / 2.0
        kernel = kernel * (
            1.0 / (std * math.sqrt(2 * math.pi))
            * jnp.exp(-(((mgrid - mean) / std) ** 2) / 2.0)
        )
    kernel = kernel / jnp.sum(kernel)
    kernel = kernel.reshape((1, 1) + kernel.shape)
    return jnp.tile(kernel, (channels, 1, 1, 1))


def _smooth_kernel(x_ref, o_ref, *, wx, wy, ho, wo):
    # x_ref: (P, H, W)   P planes (flattened N*C)
    # o_ref: (P, Ho, Wo) valid-conv output planes
    kw = len(wx)
    kh = len(wy)

    # --- Horizontal (lane-direction) 1-D pass: K taps, weights are immediates.
    # Read shifted windows straight from the ref so Mosaic folds the lane
    # offset into the vector load. Two partial accumulators break the add chain.
    h0 = wx[0] * x_ref[:, :, 0:wo].astype(jnp.float32)
    h1 = None
    for v in range(1, kw):
        t = wx[v] * x_ref[:, :, v:v + wo].astype(jnp.float32)
        if v % 2 == 1:
            h1 = t if h1 is None else h1 + t
        else:
            h0 = h0 + t
    hpass = h0 if h1 is None else h0 + h1          # (P, H, Wo), f32

    # --- Vertical (sublane-direction) 1-D pass: K taps, sublane offsets only.
    v0 = wy[0] * hpass[:, 0:ho, :]
    v1 = None
    for u in range(1, kh):
        t = wy[u] * hpass[:, u:u + ho, :]
        if u % 2 == 1:
            v1 = t if v1 is None else v1 + t
        else:
            v0 = v0 + t
    acc = v0 if v1 is None else v0 + v1            # (P, Ho, Wo), f32

    o_ref[...] = acc.astype(o_ref.dtype)


def _choose_planes_per_block(nc, h, w, itemsize, vmem_budget_bytes=8 * 1024 * 1024):
    """Largest divisor of nc whose input block fits the budget, keeping >=2 grid steps."""
    divisors = [d for d in range(1, nc + 1) if nc % d == 0]
    fitting = [d for d in divisors if d * h * w * itemsize <= vmem_budget_bytes] or [1]
    p = max(fitting)
    if p == nc and nc > 1:
        smaller = [d for d in fitting if d < nc]
        if smaller:
            p = max(smaller)   # leave at least 2 grid steps (v7x megacore)
    return p


def gaussian_smoothing(x, kernel_size, sigma, dim: int = 2):
    """Depthwise valid Gaussian blur, groups == channels.  x: (N, C, H, W)."""
    assert dim == 2, "this Pallas kernel implements the dim=2 (spatial) case"
    if isinstance(kernel_size, (int, float)):
        kernel_size = [int(kernel_size)] * dim
    if isinstance(sigma, (int, float)):
        sigma = [float(sigma)] * dim
    kh, kw = int(kernel_size[0]), int(kernel_size[1])
    # Separable taps (outer(wy, wx) == the module's normalized 2D kernel).
    wy = _gaussian_taps_1d(kh, float(sigma[0]))
    wx = _gaussian_taps_1d(kw, float(sigma[1]))

    n, c, h, w = x.shape
    assert h >= kh and w >= kw, "input spatial dims must be >= kernel_size (valid conv)"
    ho, wo = h - kh + 1, w - kw + 1
    nc = n * c
    x3 = x.reshape(nc, h, w)

    p = _choose_planes_per_block(nc, h, w, x.dtype.itemsize)
    grid = (nc // p,)

    kernel = functools.partial(_smooth_kernel, wx=wx, wy=wy, ho=ho, wo=wo)
    out3 = pl.pallas_call(
        kernel,
        out_shape=jax.ShapeDtypeStruct((nc, ho, wo), x.dtype),
        grid_spec=pltpu.PrefetchScalarGridSpec(
            num_scalar_prefetch=0,
            grid=grid,
            in_specs=[pl.BlockSpec((p, h, w), lambda i: (i, 0, 0))],
            out_specs=pl.BlockSpec((p, ho, wo), lambda i: (i, 0, 0)),
        ),
        compiler_params=pltpu.CompilerParams(
            dimension_semantics=("parallel",),
            vmem_limit_bytes=64 * 1024 * 1024,
        ),
    )(x3)
    return out3.reshape(n, c, ho, wo)


if __name__ == "__main__":
    # Module parameters (deterministic, synthetic).
    channels = 4
    kernel_size = 3
    sigma = 1.0

    # Example input, NCHW.
    key = jax.random.PRNGKey(0)
    x = jax.random.normal(key, (2, channels, 16, 16), dtype=jnp.float32)

    out = gaussian_smoothing(x, kernel_size, sigma, dim=2)
    out = jax.block_until_ready(out)

    # Reference: plain-JAX grouped conv with the module's exact (C,1,K,K) weight.
    weight = make_gaussian_weight(channels, kernel_size, sigma, dim=2)
    ref = jax.lax.conv_general_dilated(
        x, weight,
        window_strides=(1, 1), padding="VALID",
        dimension_numbers=("NCHW", "OIHW", "NCHW"),
        feature_group_count=channels,
    )
    assert out.shape == (2, channels, 14, 14)
    assert jnp.allclose(out, ref, atol=1e-5, rtol=1e-5)
    print("KERNEL_OK")
</pallas_src>

<mosaic_0001>
module attributes {stable_mosaic.version = 11 : i64} {
  func.func @_smooth_kernel(%arg0: i32, %arg1: memref<4x16x16xf32, #tpu.memory_space<vmem>>, %arg2: memref<4x14x14xf32, #tpu.memory_space<vmem>>) attributes {dimension_semantics = [#tpu.dimension_semantics<parallel>], iteration_bounds = array<i64: 2>, scalar_prefetch = 0 : i64, scratch_operands = 0 : i64, tpu.core_type = #tpu.core_type<tc>, window_params = [{transform_indices = @transform_0, window_bounds = array<i64: 4, 16, 16>}, {transform_indices = @transform_1, window_bounds = array<i64: 4, 14, 14>}]} {
    %c0 = arith.constant 0 : index
    %c0_0 = arith.constant 0 : index
    %c0_1 = arith.constant 0 : index
    %0 = vector.load %arg1[%c0, %c0_0, %c0_1] : memref<4x16x16xf32, #tpu.memory_space<vmem>>, vector<4x16x14xf32>
    %cst = arith.constant 0.274068624 : f32
    %1 = vector.broadcast %cst : f32 to vector<4x16x14xf32>
    %2 = arith.mulf %1, %0 : vector<4x16x14xf32>
    %c0_2 = arith.constant 0 : index
    %c0_3 = arith.constant 0 : index
    %c1 = arith.constant 1 : index
    %3 = vector.load %arg1[%c0_2, %c0_3, %c1] : memref<4x16x16xf32, #tpu.memory_space<vmem>>, vector<4x16x14xf32>
    %cst_4 = arith.constant 0.451862752 : f32
    %4 = vector.broadcast %cst_4 : f32 to vector<4x16x14xf32>
    %5 = arith.mulf %4, %3 : vector<4x16x14xf32>
    %c0_5 = arith.constant 0 : index
    %c0_6 = arith.constant 0 : index
    %c2 = arith.constant 2 : index
    %6 = vector.load %arg1[%c0_5, %c0_6, %c2] : memref<4x16x16xf32, #tpu.memory_space<vmem>>, vector<4x16x14xf32>
    %cst_7 = arith.constant 0.274068624 : f32
    %7 = vector.broadcast %cst_7 : f32 to vector<4x16x14xf32>
    %8 = arith.mulf %7, %6 : vector<4x16x14xf32>
    %9 = arith.addf %2, %8 : vector<4x16x14xf32>
    %10 = arith.addf %9, %5 : vector<4x16x14xf32>
    %11 = vector.extract_strided_slice %10 {offsets = [0, 0, 0], sizes = [4, 14, 14], strides = [1, 1, 1]} : vector<4x16x14xf32> to vector<4x14x14xf32>
    %cst_8 = arith.constant 0.274068624 : f32
    %12 = vector.broadcast %cst_8 : f32 to vector<4x14x14xf32>
    %13 = arith.mulf %12, %11 : vector<4x14x14xf32>
    %14 = vector.extract_strided_slice %10 {offsets = [0, 1, 0], sizes = [4, 14, 14], strides = [1, 1, 1]} : vector<4x16x14xf32> to vector<4x14x14xf32>
    %cst_9 = arith.constant 0.451862752 : f32
    %15 = vector.broadcast %cst_9 : f32 to vector<4x14x14xf32>
    %16 = arith.mulf %15, %14 : vector<4x14x14xf32>
    %17 = vector.extract_strided_slice %10 {offsets = [0, 2, 0], sizes = [4, 14, 14], strides = [1, 1, 1]} : vector<4x16x14xf32> to vector<4x14x14xf32>
    %cst_10 = arith.constant 0.274068624 : f32
    %18 = vector.broadcast %cst_10 : f32 to vector<4x14x14xf32>
    %19 = arith.mulf %18, %17 : vector<4x14x14xf32>
    %20 = arith.addf %13, %19 : vector<4x14x14xf32>
    %21 = arith.addf %20, %16 : vector<4x14x14xf32>
    %c0_11 = arith.constant 0 : index
    %c0_12 = arith.constant 0 : index
    %c0_13 = arith.constant 0 : index
    %22 = vector.load %arg2[%c0_11, %c0_12, %c0_13] : memref<4x14x14xf32, #tpu.memory_space<vmem>>, vector<4x14x14xf32>
    tpu.vector_store %arg2[%c0_11, %c0_12, %c0_13], %21 {strides = array<i32>} : memref<4x14x14xf32, #tpu.memory_space<vmem>>, vector<4x14x14xf32>,
    return
  }
  func.func @transform_0(%arg0: i32) -> (i32, i32, i32) {
    %c0_i32 = arith.constant 0 : i32
    %c0_i32_0 = arith.constant 0 : i32
    %c0_i32_1 = arith.constant 0 : i32
    return %arg0, %c0_i32, %c0_i32_0 : i32, i32, i32
  }
  func.func @transform_1(%arg0: i32) -> (i32, i32, i32) {
    %c0_i32 = arith.constant 0 : i32
    %c0_i32_0 = arith.constant 0 : i32
    %c0_i32_1 = arith.constant 0 : i32
    return %arg0, %c0_i32, %c0_i32_0 : i32, i32, i32
  }
}

</mosaic_0001>

<llo_original>
// kernel: tpu_custom_call.1
$region0: #{tpu_custom_call.1}
  #allocation0 [shape = 'u32[]', space=smem, size = 0x4, offset = 0x4, fixed_abs, tag = 'smem constant byte address 0x4 - core index']
  #allocation1 [shape = 'u32[144,128]{1,0:T(1,128)}', space=vmem, size = 0x12000, scoped, tag = 'internal scratch']
  %s0 = inlined_call_operand.hbm [shape: f32[8,16,16], index: 0, kind: input, shape index: {}]
  %s1 = inlined_call_operand.hbm [shape: f32[8,14,14], index: 1, kind: output, shape index: {}]
  %s2 = sld [smem:[#allocation0]]
  $region41: #{tpu_custom_call.1} parent=0
    _
  %s4 = ssub.s32 1, %s2
  %s5 = scalar_select 0, %s4, %s2
  $region1: #{tpu_custom_call.1} parent=0
    #allocation2 [shape = 'u8[65536]{0}', space=vmem, size = 0x10000, scoped, tag = 'input window, operand 0']
    #allocation3 [shape = 's32[2]{0}', space=sflag, size = 0x8, scoped, tag = 'scoped memory for tpu_custom_call.1']
    #allocation4 [shape = 's32[2]{0}', space=sflag, size = 0x8, scoped, tag = 'scoped memory for tpu_custom_call.1']
    #allocation5 [shape = 'u8[65536]{0}', space=vmem, size = 0x10000, scoped, tag = 'output window, operand 0']
    %6 = vsyncpa [#allocation3], 0
    %s7 = scalar_lea.sflag [#allocation3], 1
    %8 = vsyncpa %s7, 0
    %9 = vsyncpa [#allocation4], 0
    %s10 = scalar_lea.sflag [#allocation4], 1
    %11 = vsyncpa %s10, 0
    loop: start=0, step=1, limit=4
    $region2: #{tpu_custom_call.1} parent=1 // loop_pre_header
      _
    $region3: #{tpu_custom_call.1} parent=1 // loop_header
      %s13 = sphi 0, %s17
      %p14 = scmp.ge.s32.totalorder %s13, 4
      %s23 = sphi 0, %s25
      %s26 = sphi 0, %s23
      %s27 = sphi 0, %s26
      %s43 = sphi 0, %s27
      %s49 = sphi 0, %s51
      %s52 = sphi 0, %s49
      %s53 = sphi 0, %s52
      %s69 = sphi 0, %s53
    $region4: #{tpu_custom_call.1} parent=1 // loop_header_branch
      %16 = sbr.rel (%p14) target = $region8
    $region5: #{tpu_custom_call.1} parent=1 // loop_body
      %s18 = ssub.s32 %s13, 1
      %s19 = ssub.s32 %s13, 2
      %s20 = sadd.s32 %s13, 1
      %s21 = ssub.s32 %s13, %s20
      %p22 = scmp.eq.s32.totalorder %s21, 0
      %s24 = sadd.s32 %s23, 1
      %s25 = scalar_select %p22, %s23, %s24
      %p28 = pneg %p22
      %p29 = scmp.eq.s32.totalorder %s13, 1
      %p30 = por %p28, %p29
      %p31 = scmp.ne.s32.totalorder %s23, %s26
      %p32 = scmp.eq.s32.totalorder %s13, 0
      %p33 = por %p31, %p32
      %p34 = scmp.ne.s32.totalorder %s23, %s26
      %p35 = scmp.eq.s32.totalorder %s18, 1
      %p36 = por %p34, %p35
      %p37 = scmp.ne.s32.totalorder %s26, %s27
      %p38 = scmp.eq.s32.totalorder %s18, 0
      %p39 = por %p37, %p38
      %p40 = scmp.ne.s32.totalorder %s26, %s27
      %p41 = scmp.eq.s32.totalorder %s19, 1
      %p42 = por %p40, %p41
      %p44 = scmp.ne.s32.totalorder %s27, %s43
      %p45 = scmp.eq.s32.totalorder %s19, 0
      %p46 = por %p44, %p45
      %s47 = ssub.s32 %s13, %s20
      %p48 = scmp.eq.s32.totalorder %s47, 0
      %s50 = sadd.s32 %s49, 1
      %s51 = scalar_select %p48, %s49, %s50
      %p54 = pneg %p48
      %p55 = scmp.eq.s32.totalorder %s13, 1
      %p56 = por %p54, %p55
      %p57 = scmp.ne.s32.totalorder %s49, %s52
      %p58 = scmp.eq.s32.totalorder %s13, 0
      %p59 = por %p57, %p58
      %p60 = scmp.ne.s32.totalorder %s49, %s52
      %p61 = scmp.eq.s32.totalorder %s18, 1
      %p62 = por %p60, %p61
      %p63 = scmp.ne.s32.totalorder %s52, %s53
      %p64 = scmp.eq.s32.totalorder %s18, 0
      %p65 = por %p63, %p64
      %p66 = scmp.ne.s32.totalorder %s52, %s53
      %p67 = scmp.eq.s32.totalorder %s19, 1
      %p68 = por %p66, %p67
      %p70 = scmp.ne.s32.totalorder %s53, %s69
      %p71 = scmp.eq.s32.totalorder %s19, 0
      %p72 = por %p70, %p71
      %p73 = scmp.le.s32.totalorder 1, %s13
      %p74 = scmp.lt.s32.totalorder %s13, 3
      %p75 = pnand %p73, %p74
      %p76 = pneg %p75
      // Predicated region
      $region9: #{tpu_custom_call.1} parent=5 // pred_check
        _
      $region10: #{tpu_custom_call.1} parent=5 // pred_check_branch
        %78 = sbr.rel (%p75) target = $region12
      $region11: #{tpu_custom_call.1} parent=5 // pred_region
        %s79 = ssub.s32 %s13, 1
      $region12: #{tpu_custom_call.1} parent=5 // pred_fallthru
        _
      %p80 = scmp.lt.s32.totalorder %s13, 2
      // Predicated region
      $region13: #{tpu_custom_call.1} parent=5 // pred_check
        %p81 = pneg %p80
      $region14: #{tpu_custom_call.1} parent=5 // pred_check_branch
        %83 = sbr.rel (%p81) target = $region16
      $region15: #{tpu_custom_call.1} parent=5 // pred_region
        // Predicated region
        $region17: #{tpu_custom_call.1} parent=15 // pred_check
          %p84 = pneg %p33
        $region18: #{tpu_custom_call.1} parent=15 // pred_check_branch
          %86 = sbr.rel (%p84) target = $region20
        $region19: #{tpu_custom_call.1} parent=15 // pred_region
          %s87 = sand.u32 %s23, 1
          %s88 = scalar_lea.sflag [#allocation3], %s87
          %s89 = sand.u32 %s23, 1
          %s90 = smul.addr %s89, 64
          %s91 = scalar_lea.vmem [#allocation2], %s90
          %s92 = smul.u32 4, %s13
          %s94 = ssub.s32 1024, 1024
          %95 = vsyncadd %s88, %s94
          %s96 = smul.addr %s92, 2
          %s97 = smul.addr %s96, 128
          %s98 = scalar_lea.hbm %s0, %s97
          %s99 = sshll.u32 %s91, 4
          %s100 = int_to_ptr.vmem [resolvable:$true] %s99
          %105 = dma.hbm_to_vmem [thread:$0]  %s98, 1024, %s100, %s88, 128, 128, 8
        $region20: #{tpu_custom_call.1} parent=15 // pred_fallthru
          _
      $region16: #{tpu_custom_call.1} parent=5 // pred_fallthru
        _
      %p106 = scmp.le.s32.totalorder 1, %s13
      %p107 = scmp.lt.s32.totalorder %s13, 3
      %p108 = pnand %p106, %p107
      %p109 = pneg %p108
      // Predicated region
      $region21: #{tpu_custom_call.1} parent=5 // pred_check
        _
      $region22: #{tpu_custom_call.1} parent=5 // pred_check_branch
        %111 = sbr.rel (%p108) target = $region24
      $region23: #{tpu_custom_call.1} parent=5 // pred_region
        %s112 = ssub.s32 %s13, 1
        %s113 = sand.u32 %s26, 1
        %s114 = scalar_lea.sflag [#allocation3], %s113
        %s115 = sand.u32 %s26, 1
        %s116 = smul.addr %s115, 64
        %s117 = scalar_lea.vmem [#allocation2], %s116
        // Predicated region
        $region25: #{tpu_custom_call.1} parent=23 // pred_check
          %p118 = pneg %p39
        $region26: #{tpu_custom_call.1} parent=23 // pred_check_branch
          %120 = sbr.rel (%p118) target = $region28
        $region27: #{tpu_custom_call.1} parent=23 // pred_region
          %121 = dma.done %s114, 1024
        $region28: #{tpu_custom_call.1} parent=23 // pred_fallthru
          _
        %s122 = sand.u32 %s26, 1
        %s123 = scalar_lea.sflag [#allocation3], %s122
        %s124 = sand.u32 %s26, 1
        %s125 = smul.addr %s124, 64
        %s126 = scalar_lea.vmem [#allocation2], %s125
        %p127 = pneg %p39
        %p128 = pneg %p36
        %p129 = pneg %p65
        %p130 = pneg %p62
        %s131 = sand.u32 %s52, 1
        %s132 = scalar_lea.sflag [#allocation4], %s131
        %s133 = sand.u32 %s52, 1
        %s134 = smul.addr %s133, 64
        %s135 = scalar_lea.vmem [#allocation5], %s134
        %s136 = smul.u32 4, %s18
        %s137 = smul.u32 4, %s18
        %v138 = vld [vmem:[%s117] sm:$0xff]
        %v139 = vld [vmem:[%s117 + $0x8] sm:$0xff]
        %v140 = vld [vmem:[%s117 + $0x10] sm:$0xff]
        %v141 = vld [vmem:[%s117 + $0x18] sm:$0xff]
        %v142 = vld [vmem:[%s117 + $0x20] sm:$0xff]
        %v143 = vld [vmem:[%s117 + $0x28] sm:$0xff]
        %v144 = vld [vmem:[%s117 + $0x30] sm:$0xff]
        %v145 = vld [vmem:[%s117 + $0x38] sm:$0xff]
        %v146 = vmul.f32 %v138, 0.27406862
        %v147 = vmul.f32 %v139, 0.27406862
        %v148 = vmul.f32 %v140, 0.27406862
        %v149 = vmul.f32 %v141, 0.27406862
        %v150 = vmul.f32 %v142, 0.27406862
        %v151 = vmul.f32 %v143, 0.27406862
        %v152 = vmul.f32 %v144, 0.27406862
        %v153 = vmul.f32 %v145, 0.27406862
        %v154 = vmul.f32 %v138, 0.45186275
        %v155 = vmul.f32 %v139, 0.45186275
        %v156 = vmul.f32 %v140, 0.45186275
        %v157 = vmul.f32 %v141, 0.45186275
        %v158 = vmul.f32 %v142, 0.45186275
        %v159 = vmul.f32 %v143, 0.45186275
        %v160 = vmul.f32 %v144, 0.45186275
        %v161 = vmul.f32 %v145, 0.45186275
        %170 = vrot.lane.b32.xlu0 %v146, 126
        %v171 = vpop.permute.xlu0 %170
        %172 = vrot.lane.b32.xlu0 %v147, 126
        %v173 = vpop.permute.xlu0 %172
        %174 = vrot.lane.b32.xlu0 %v148, 126
        %v175 = vpop.permute.xlu0 %174
        %176 = vrot.lane.b32.xlu0 %v149, 126
        %v177 = vpop.permute.xlu0 %176
        %178 = vrot.lane.b32.xlu0 %v150, 126
        %v179 = vpop.permute.xlu0 %178
        %180 = vrot.lane.b32.xlu0 %v151, 126
        %v181 = vpop.permute.xlu0 %180
        %182 = vrot.lane.b32.xlu0 %v152, 126
        %v183 = vpop.permute.xlu0 %182
        %184 = vrot.lane.b32.xlu0 %v153, 126
        %v185 = vpop.permute.xlu0 %184
        %v194 = vadd.f32 %v146, %v171
        %v195 = vadd.f32 %v147, %v173
        %v196 = vadd.f32 %v148, %v175
        %v197 = vadd.f32 %v149, %v177
        %v198 = vadd.f32 %v150, %v179
        %v199 = vadd.f32 %v151, %v181
        %v200 = vadd.f32 %v152, %v183
        %v201 = vadd.f32 %v153, %v185
        %210 = vrot.lane.b32.xlu0 %v154, 127
        %v211 = vpop.permute.xlu0 %210
        %212 = vrot.lane.b32.xlu0 %v155, 127
        %v213 = vpop.permute.xlu0 %212
        %214 = vrot.lane.b32.xlu0 %v156, 127
        %v215 = vpop.permute.xlu0 %214
        %216 = vrot.lane.b32.xlu0 %v157, 127
        %v217 = vpop.permute.xlu0 %216
        %218 = vrot.lane.b32.xlu0 %v158, 127
        %v219 = vpop.permute.xlu0 %218
        %220 = vrot.lane.b32.xlu0 %v159, 127
        %v221 = vpop.permute.xlu0 %220
        %222 = vrot.lane.b32.xlu0 %v160, 127
        %v223 = vpop.permute.xlu0 %222
        %224 = vrot.lane.b32.xlu0 %v161, 127
        %v225 = vpop.permute.xlu0 %224
        %v234 = vadd.f32 %v194, %v211
        %v235 = vadd.f32 %v195, %v213
        %v236 = vadd.f32 %v196, %v215
        %v237 = vadd.f32 %v197, %v217
        %v238 = vadd.f32 %v198, %v219
        %v239 = vadd.f32 %v199, %v221
        %v240 = vadd.f32 %v200, %v223
        %v241 = vadd.f32 %v201, %v225
        %v242 = vmul.f32 %v234, 0.27406862
        %v243 = vmul.f32 %v235, 0.27406862
        %v244 = vmul.f32 %v236, 0.27406862
        %v245 = vmul.f32 %v237, 0.27406862
        %v246 = vmul.f32 %v238, 0.27406862
        %v247 = vmul.f32 %v239, 0.27406862
        %v248 = vmul.f32 %v240, 0.27406862
        %v249 = vmul.f32 %v241, 0.27406862
        %v250 = vmul.f32 %v234, 0.45186275
        %v251 = vmul.f32 %v235, 0.45186275
        %v252 = vmul.f32 %v236, 0.45186275
        %v253 = vmul.f32 %v237, 0.45186275
        %v254 = vmul.f32 %v238, 0.45186275
        %v255 = vmul.f32 %v239, 0.45186275
        %v256 = vmul.f32 %v240, 0.45186275
        %v257 = vmul.f32 %v241, 0.45186275
        %vm266 = vcmask 1045504
        %v267 = vrot.slane %v242, 2
        %v268 = vrot.slane %v243, 2
        %v269 = vsel %vm266, %v267, %v268
        %v270 = vrot.slane %v244, 2
        %v271 = vrot.slane %v245, 2
        %v272 = vsel %vm266, %v270, %v271
        %v273 = vrot.slane %v246, 2
        %v274 = vrot.slane %v247, 2
        %v275 = vsel %vm266, %v273, %v274
        %v276 = vrot.slane %v248, 2
        %v277 = vrot.slane %v249, 2
        %v278 = vsel %vm266, %v276, %v277
        %v287 = vadd.f32 %v242, %v269
        %v288 = vadd.f32 %v243, %v268
        %v289 = vadd.f32 %v244, %v272
        %v290 = vadd.f32 %v245, %v271
        %v291 = vadd.f32 %v246, %v275
        %v292 = vadd.f32 %v247, %v274
        %v293 = vadd.f32 %v248, %v278
        %v294 = vadd.f32 %v249, %v277
        %vm303 = vcmask 1046528
        %v304 = vrot.slane %v250, 1
        %v305 = vrot.slane %v251, 1
        %v306 = vsel %vm303, %v304, %v305
        %v307 = vrot.slane %v252, 1
        %v308 = vrot.slane %v253, 1
        %v309 = vsel %vm303, %v307, %v308
        %v310 = vrot.slane %v254, 1
        %v311 = vrot.slane %v255, 1
        %v312 = vsel %vm303, %v310, %v311
        %v313 = vrot.slane %v256, 1
        %v314 = vrot.slane %v257, 1
        %v315 = vsel %vm303, %v313, %v314
        %v324 = vadd.f32 %v287, %v306
        %v325 = vadd.f32 %v288, %v305
        %v326 = vadd.f32 %v289, %v309
        %v327 = vadd.f32 %v290, %v308
        %v328 = vadd.f32 %v291, %v312
        %v329 = vadd.f32 %v292, %v311
        %v330 = vadd.f32 %v293, %v315
        %v331 = vadd.f32 %v294, %v314
        %vm332 = vcmask 113664
        %333 = vst.msk [vmem:[%s135] sm:$0xff] %vm332, %v324
        %vm334 = vcmask 111616
        %335 = vst.msk [vmem:[%s135 + $0x8] sm:$0x3f] %vm334, %v325
        %336 = vst.msk [vmem:[%s135 + $0x10] sm:$0xff] %vm332, %v326
        %337 = vst.msk [vmem:[%s135 + $0x18] sm:$0x3f] %vm334, %v327
        %338 = vst.msk [vmem:[%s135 + $0x20] sm:$0xff] %vm332, %v328
        %339 = vst.msk [vmem:[%s135 + $0x28] sm:$0x3f] %vm334, %v329
        %340 = vst.msk [vmem:[%s135 + $0x30] sm:$0xff] %vm332, %v330
        %341 = vst.msk [vmem:[%s135 + $0x38] sm:$0x3f] %vm334, %v331
        %s342 = sand.u32 %s52, 1
        %s343 = scalar_lea.sflag [#allocation4], %s342
        %s344 = sand.u32 %s52, 1
        %s345 = smul.addr %s344, 64
        %s346 = scalar_lea.vmem [#allocation5], %s345
        // Predicated region
        $region29: #{tpu_custom_call.1} parent=23 // pred_check
          %p347 = pneg %p62
        $region30: #{tpu_custom_call.1} parent=23 // pred_check_branch
          %349 = sbr.rel (%p347) target = $region32
        $region31: #{tpu_custom_call.1} parent=23 // pred_region
          %s350 = smul.u32 4, %s18
          %s352 = ssub.s32 1024, 1024
          %353 = vsyncadd %s343, %s352
          %s354 = smul.addr %s350, 2
          %s355 = smul.addr %s354, 128
          %s356 = scalar_lea.hbm %s1, %s355
          %s357 = sshll.u32 %s346, 4
          %s358 = int_to_ptr.vmem [resolvable:$true] %s357
          %363 = dma.vmem_to_hbm [thread:$0]  %s358, 1024, %s356, %s343, 128, 128, 8
        $region32: #{tpu_custom_call.1} parent=23 // pred_fallthru
          _
      $region24: #{tpu_custom_call.1} parent=5 // pred_fallthru
        _
      %p364 = scmp.le.s32.totalorder 2, %s13
      // Predicated region
      $region33: #{tpu_custom_call.1} parent=5 // pred_check
        %p365 = pneg %p364
      $region34: #{tpu_custom_call.1} parent=5 // pred_check_branch
        %367 = sbr.rel (%p365) target = $region36
      $region35: #{tpu_custom_call.1} parent=5 // pred_region
        %s368 = ssub.s32 %s13, 2
        // Predicated region
        $region37: #{tpu_custom_call.1} parent=35 // pred_check
          %p369 = pneg %p68
        $region38: #{tpu_custom_call.1} parent=35 // pred_check_branch
          %371 = sbr.rel (%p369) target = $region40
        $region39: #{tpu_custom_call.1} parent=35 // pred_region
          %s372 = sand.u32 %s53, 1
          %s373 = scalar_lea.sflag [#allocation4], %s372
          %s374 = sand.u32 %s53, 1
          %s375 = smul.addr %s374, 64
          %s376 = scalar_lea.vmem [#allocation5], %s375
          %377 = dma.done %s373, 1024
        $region40: #{tpu_custom_call.1} parent=35 // pred_fallthru
          _
      $region36: #{tpu_custom_call.1} parent=5 // pred_fallthru
        _
    $region6: #{tpu_custom_call.1} parent=1 // loop_footer
      %s17 = sadd.s32 1, %s13
    $region7: #{tpu_custom_call.1} parent=1 // loop_footer_branch
      %12 = sbr.rel target = $region3
    $region8: #{tpu_custom_call.1} parent=1 // loop_exit
      _
    %378 = vsyncpa [#allocation3], 1
    %s379 = scalar_lea.sflag [#allocation3], 1
    %380 = vsyncpa %s379, 1
    %381 = vsyncpa [#allocation4], 1
    %s382 = scalar_lea.sflag [#allocation4], 1
    %383 = vsyncpa %s382, 1

</llo_original>
